<compile_context>
chip_gen: v7x
topology: tpu7x:2x2x1
jax: 0.10.0
libtpu: 0.0.40
codegen_flags: <defaults>
</compile_context>

<pallas_src>
import math
from functools import partial

import numpy as np
import jax
import jax.numpy as jnp
from jax import lax
from jax.experimental import pallas as pl
from jax.experimental.pallas import tpu as pltpu


# ----------------------------- kernel helpers -----------------------------

def _gelu(x):
    # exact GELU (erf based), matching torch.nn.GELU() default
    return 0.5 * x * (1.0 + lax.erf(x * (1.0 / math.sqrt(2.0))))


def _layernorm(x, gamma, beta, eps=1e-5):
    mu = jnp.mean(x, axis=-1, keepdims=True)
    var = jnp.mean((x - mu) ** 2, axis=-1, keepdims=True)
    return (x - mu) * lax.rsqrt(var + eps) * gamma + beta


# ------------------------------- the kernel --------------------------------

def attention_pooling_kernel(
    latent_ref, bias_ref, expand_ref,
    w_in_ref, w_a1_ref, w_a2_ref, w_out_ref, vec_ref,
    out_ref,
    *, bt, tokens, num_heads,
):
    m = bt * tokens
    H = w_in_ref.shape[1]
    cd = w_in_ref.dtype                       # MXU operand dtype (f32 here; bf16 in prod)

    # Packed row vectors: b_in, g_in, be_in, b_a1, b_out, g_out, be_out, b_a2(padded)
    vec = vec_ref[...]                        # (8, H) f32
    b_in, g_in, be_in = vec[0:1], vec[1:2], vec[2:3]
    b_a1 = vec[3:4]
    b_out, g_out, be_out = vec[4:5], vec[5:6], vec[6:7]
    b_a2 = vec[7:8, :num_heads]

    x = latent_ref[...]                       # (Bt*P, Din), already flattened

    # --- input_layer: Linear -> LayerNorm -> GELU ---
    h = jnp.dot(x.astype(cd), w_in_ref[...], preferred_element_type=jnp.float32) + b_in
    h = _gelu(_layernorm(h, g_in, be_in))                               # (Bt*P, H) f32

    # --- attention: Linear -> GELU -> Linear ---
    a = _gelu(jnp.dot(h.astype(cd), w_a1_ref[...],
                      preferred_element_type=jnp.float32) + b_a1)
    s = jnp.dot(a.astype(cd), w_a2_ref[...],
                preferred_element_type=jnp.float32) + b_a2              # (Bt*P, nh)

    # --- mask + per-(batch, head) softmax over the token axis ---
    # bias_ref already carries mask * (-1e8); broadcast over heads.
    s3 = s.reshape(bt, tokens, num_heads) + bias_ref[...][:, :, None]   # (Bt, P, nh)
    s3 = s3 - jnp.max(s3, axis=1, keepdims=True)
    e = jnp.exp(s3)
    att3 = e / jnp.sum(e, axis=1, keepdims=True)    # exact divide (accuracy fix)

    # --- per-head weighted pooling: MXU head-expand, then XLU token reduce ---
    # expand (nh, H): column n*hd+d carries head n -> per-head weight on all H cols
    att_full = jnp.dot(att3.reshape(m, num_heads).astype(cd), expand_ref[...],
                       preferred_element_type=jnp.float32)              # (Bt*P, H)
    pooled = jnp.sum((att_full * h).reshape(bt, tokens, H), axis=1)     # (Bt, H)

    # --- output_layer: Linear -> LayerNorm -> GELU ---
    o = jnp.dot(pooled.astype(cd), w_out_ref[...],
                preferred_element_type=jnp.float32) + b_out
    out_ref[...] = _gelu(_layernorm(o, g_out, be_out)).astype(out_ref.dtype)


# ------------------------------- wrapper ------------------------------------

def attention_pooling(latent, mask, params, *, num_heads):
    B, P, Din = latent.shape
    H = params["w_in"].shape[1]
    assert H % num_heads == 0, "hidden_dim must be divisible by num_heads"
    head_dim = H // num_heads
    wdt = params["w_in"].dtype

    # Batch tile: target ~512 rows in the matmul M dimension. Keep tiles
    # sublane-aligned when the batch is actually split.
    # TODO(synk): when B is large on v7x, prefer a bt that keeps n_steps even
    # so both TensorCores are fed by the "parallel" axis.
    bt = max(1, min(B, pl.cdiv(512, P)))
    if bt < B and bt % 8 != 0:
        bt = ((bt + 7) // 8) * 8
    n_steps = pl.cdiv(B, bt)
    bp = n_steps * bt
    pad = bp - B

    # Flatten tokens into the matmul M dim (free reshape); only pad when a
    # ragged last tile actually exists (no unconditional full-array copy).
    latent_flat = latent.reshape(B * P, Din)
    if pad:
        latent_flat = jnp.pad(latent_flat, ((0, pad * P), (0, 0)))
    # Fold the *(-1e8) into the mask on the host (tiny array).
    mask_bias = mask.astype(jnp.float32) * (-100000000.0)
    if pad:
        mask_bias = jnp.pad(mask_bias, ((0, pad), (0, 0)))

    # Host-precomputed per-head expansion matrix (resident constant).
    expand = (jnp.arange(H, dtype=jnp.int32)[None, :] // head_dim
              == jnp.arange(num_heads, dtype=jnp.int32)[:, None]).astype(wdt)   # (nh, H)

    # Pack the eight (1, H)-ish bias / gamma / beta vectors into one (8, H) constant.
    vecs = jnp.concatenate([
        params["b_in"], params["g_in"], params["be_in"], params["b_a1"],
        params["b_out"], params["g_out"], params["be_out"],
        jnp.pad(params["b_a2"], ((0, 0), (0, H - num_heads))),
    ], axis=0).astype(jnp.float32)                                               # (8, H)

    def const_spec(shape):
        # Grid-invariant input: single-buffered (halves resident-weight VMEM).
        return pl.BlockSpec(shape, lambda b: (0, 0), pipeline_mode=pl.Buffered(1))

    in_specs = [
        pl.BlockSpec((bt * P, Din), lambda b: (b, 0)),   # latent tile (flattened)
        pl.BlockSpec((bt, P), lambda b: (b, 0)),         # mask bias tile
        const_spec((num_heads, H)),                      # expand
        const_spec((Din, H)),                            # w_in
        const_spec((H, H)),                              # w_a1
        const_spec((H, num_heads)),                      # w_a2
        const_spec((H, H)),                              # w_out
        const_spec((8, H)),                              # packed bias/gamma/beta
    ]
    out_spec = pl.BlockSpec((bt, H), lambda b: (b, 0))   # dense 2-D output slab

    kernel = partial(attention_pooling_kernel, bt=bt, tokens=P, num_heads=num_heads)
    out = pl.pallas_call(
        kernel,
        out_shape=jax.ShapeDtypeStruct((bp, H), jnp.float32),
        grid_spec=pltpu.PrefetchScalarGridSpec(
            num_scalar_prefetch=0,
            grid=(n_steps,),
            in_specs=in_specs,
            out_specs=out_spec,
        ),
        compiler_params=pltpu.CompilerParams(
            dimension_semantics=("parallel",),           # batch tiles are independent
            # 48 MiB is safe on v7x (64 MiB physical); raise toward ~96 MiB on
            # v5e/v6e if profiling wants a bigger batch tile.
            vmem_limit_bytes=48 * 1024 * 1024,
        ),
    )(latent_flat, mask_bias, expand,
      params["w_in"], params["w_a1"], params["w_a2"], params["w_out"], vecs)
    return out[:B]


# --------------------------- pure-JAX reference -----------------------------

def attention_pooling_ref(latent, mask, params, *, num_heads):
    B, P, _ = latent.shape
    H = params["w_in"].shape[1]
    hd = H // num_heads
    erf = jax.scipy.special.erf

    def ln(x, g, b):
        mu = x.mean(-1, keepdims=True)
        var = ((x - mu) ** 2).mean(-1, keepdims=True)
        return (x - mu) / jnp.sqrt(var + 1e-5) * g + b

    def gelu(x):
        return 0.5 * x * (1.0 + erf(x / jnp.sqrt(2.0)))

    h = gelu(ln(latent @ params["w_in"] + params["b_in"], params["g_in"], params["be_in"]))
    a = gelu(h @ params["w_a1"] + params["b_a1"])
    att = a @ params["w_a2"] + params["b_a2"]                      # (B, P, nh)
    att = jnp.transpose(att, (0, 2, 1)).reshape(B, num_heads, 1, P)
    att = att + mask.reshape(B, 1, 1, -1) * -100000000.0
    att = jax.nn.softmax(att, axis=-1)
    lat = h.reshape(B, P, num_heads, hd).transpose(0, 2, 1, 3)
    lat = jnp.matmul(att, lat).reshape(B, H)
    o = gelu(ln(lat @ params["w_out"] + params["b_out"], params["g_out"], params["be_out"]))
    return o


# --------------------------------- main --------------------------------------

if __name__ == "__main__":
    B, P = 2, 8
    INPUT_DIM, HIDDEN_DIM, NUM_HEADS = 16, 32, 8

    key = jax.random.PRNGKey(0)
    keys = jax.random.split(key, 12)

    def init(k, shape, scale=0.1):
        return (scale * jax.random.normal(k, shape)).astype(jnp.float32)

    params = {
        # input_layer
        "w_in": init(keys[0], (INPUT_DIM, HIDDEN_DIM)),
        "b_in": init(keys[1], (1, HIDDEN_DIM)),
        "g_in": jnp.ones((1, HIDDEN_DIM), jnp.float32),   # LayerNorm default init
        "be_in": jnp.zeros((1, HIDDEN_DIM), jnp.float32),
        # attention
        "w_a1": init(keys[2], (HIDDEN_DIM, HIDDEN_DIM)),
        "b_a1": init(keys[3], (1, HIDDEN_DIM)),
        "w_a2": init(keys[4], (HIDDEN_DIM, NUM_HEADS)),
        "b_a2": init(keys[5], (1, NUM_HEADS)),
        # output_layer
        "w_out": init(keys[6], (HIDDEN_DIM, HIDDEN_DIM)),
        "b_out": init(keys[7], (1, HIDDEN_DIM)),
        "g_out": jnp.ones((1, HIDDEN_DIM), jnp.float32),
        "be_out": jnp.zeros((1, HIDDEN_DIM), jnp.float32),
    }

    latent = jax.random.normal(keys[8], (B, P, INPUT_DIM), dtype=jnp.float32)
    mask = (jax.random.uniform(keys[9], (B, P)) < 0.3).astype(jnp.float32)

    out = attention_pooling(latent, mask, params, num_heads=NUM_HEADS)
    out = jax.block_until_ready(out)

    ref = attention_pooling_ref(latent, mask, params, num_heads=NUM_HEADS)
    np.testing.assert_allclose(np.asarray(out), np.asarray(ref), rtol=2e-3, atol=2e-3)

    print("KERNEL_OK")
</pallas_src>

<mosaic_0001>
module attributes {stable_mosaic.version = 11 : i64} {
  func.func @attention_pooling_kernel(%arg0: i32, %arg1: memref<16x16xf32, #tpu.memory_space<vmem>>, %arg2: memref<2x8xf32, #tpu.memory_space<vmem>>, %arg3: memref<8x32xf32, #tpu.memory_space<vmem>>, %arg4: memref<16x32xf32, #tpu.memory_space<vmem>>, %arg5: memref<32x32xf32, #tpu.memory_space<vmem>>, %arg6: memref<32x8xf32, #tpu.memory_space<vmem>>, %arg7: memref<32x32xf32, #tpu.memory_space<vmem>>, %arg8: memref<8x32xf32, #tpu.memory_space<vmem>>, %arg9: memref<2x32xf32, #tpu.memory_space<vmem>>) attributes {dimension_semantics = [#tpu.dimension_semantics<parallel>], iteration_bounds = array<i64: 1>, scalar_prefetch = 0 : i64, scratch_operands = 0 : i64, tpu.core_type = #tpu.core_type<tc>, window_params = [{transform_indices = @transform_0, window_bounds = array<i64: 16, 16>}, {transform_indices = @transform_1, window_bounds = array<i64: 2, 8>}, {pipeline_mode = #tpu.pipeline_mode<synchronous>, transform_indices = @transform_2, window_bounds = array<i64: 8, 32>}, {pipeline_mode = #tpu.pipeline_mode<synchronous>, transform_indices = @transform_3, window_bounds = array<i64: 16, 32>}, {pipeline_mode = #tpu.pipeline_mode<synchronous>, transform_indices = @transform_4, window_bounds = array<i64: 32, 32>}, {pipeline_mode = #tpu.pipeline_mode<synchronous>, transform_indices = @transform_5, window_bounds = array<i64: 32, 8>}, {pipeline_mode = #tpu.pipeline_mode<synchronous>, transform_indices = @transform_6, window_bounds = array<i64: 32, 32>}, {pipeline_mode = #tpu.pipeline_mode<synchronous>, transform_indices = @transform_7, window_bounds = array<i64: 8, 32>}, {transform_indices = @transform_8, window_bounds = array<i64: 2, 32>}]} {
    %c0 = arith.constant 0 : index
    %c0_0 = arith.constant 0 : index
    %0 = vector.load %arg8[%c0, %c0_0] : memref<8x32xf32, #tpu.memory_space<vmem>>, vector<8x32xf32>
    %1 = vector.extract_strided_slice %0 {offsets = [0, 0], sizes = [1, 32], strides = [1, 1]} : vector<8x32xf32> to vector<1x32xf32>
    %2 = vector.extract_strided_slice %0 {offsets = [1, 0], sizes = [1, 32], strides = [1, 1]} : vector<8x32xf32> to vector<1x32xf32>
    %3 = vector.extract_strided_slice %0 {offsets = [2, 0], sizes = [1, 32], strides = [1, 1]} : vector<8x32xf32> to vector<1x32xf32>
    %4 = vector.extract_strided_slice %0 {offsets = [3, 0], sizes = [1, 32], strides = [1, 1]} : vector<8x32xf32> to vector<1x32xf32>
    %5 = vector.extract_strided_slice %0 {offsets = [4, 0], sizes = [1, 32], strides = [1, 1]} : vector<8x32xf32> to vector<1x32xf32>
    %6 = vector.extract_strided_slice %0 {offsets = [5, 0], sizes = [1, 32], strides = [1, 1]} : vector<8x32xf32> to vector<1x32xf32>
    %7 = vector.extract_strided_slice %0 {offsets = [6, 0], sizes = [1, 32], strides = [1, 1]} : vector<8x32xf32> to vector<1x32xf32>
    %8 = vector.extract_strided_slice %0 {offsets = [7, 0], sizes = [1, 8], strides = [1, 1]} : vector<8x32xf32> to vector<1x8xf32>
    %c0_1 = arith.constant 0 : index
    %c0_2 = arith.constant 0 : index
    %9 = vector.load %arg1[%c0_1, %c0_2] : memref<16x16xf32, #tpu.memory_space<vmem>>, vector<16x16xf32>
    %c0_3 = arith.constant 0 : index
    %c0_4 = arith.constant 0 : index
    %10 = vector.load %arg4[%c0_3, %c0_4] : memref<16x32xf32, #tpu.memory_space<vmem>>, vector<16x32xf32>
    %cst = arith.constant dense<0.000000e+00> : vector<16x32xf32>
    %11 = tpu.matmul %9, %10, %cst {dimension_numbers = #tpu.dot_dimension_numbers<[1], [0], [0], [1], [0, 0, 1, 1], [], []>} : vector<16x16xf32>, vector<16x32xf32>, vector<16x32xf32> -> vector<16x32xf32>
    %12 = vector.broadcast %1 : vector<1x32xf32> to vector<16x32xf32>
    %13 = arith.addf %11, %12 : vector<16x32xf32>
    %cst_5 = arith.constant dense<0.000000e+00> : vector<16xf32>
    %14 = vector.multi_reduction <add>, %13, %cst_5 [1] : vector<16x32xf32> to vector<16xf32>
    %15 = vector.shape_cast %14 : vector<16xf32> to vector<16x1xf32>
    %cst_6 = arith.constant 3.200000e+01 : f32
    %16 = vector.broadcast %cst_6 : f32 to vector<16x1xf32>
    %17 = arith.divf %15, %16 : vector<16x1xf32>
    %18 = vector.broadcast %17 : vector<16x1xf32> to vector<16x32xf32>
    %19 = arith.subf %13, %18 : vector<16x32xf32>
    %20 = arith.mulf %19, %19 : vector<16x32xf32>
    %cst_7 = arith.constant dense<0.000000e+00> : vector<16xf32>
    %21 = vector.multi_reduction <add>, %20, %cst_7 [1] : vector<16x32xf32> to vector<16xf32>
    %22 = vector.shape_cast %21 : vector<16xf32> to vector<16x1xf32>
    %cst_8 = arith.constant 3.200000e+01 : f32
    %23 = vector.broadcast %cst_8 : f32 to vector<16x1xf32>
    %24 = arith.divf %22, %23 : vector<16x1xf32>
    %25 = vector.broadcast %17 : vector<16x1xf32> to vector<16x32xf32>
    %26 = arith.subf %13, %25 : vector<16x32xf32>
    %cst_9 = arith.constant 9.99999974E-6 : f32
    %27 = vector.broadcast %cst_9 : f32 to vector<16x1xf32>
    %28 = arith.addf %24, %27 : vector<16x1xf32>
    %29 = math.rsqrt %28 : vector<16x1xf32>
    %30 = vector.broadcast %29 : vector<16x1xf32> to vector<16x32xf32>
    %31 = arith.mulf %26, %30 : vector<16x32xf32>
    %32 = vector.broadcast %2 : vector<1x32xf32> to vector<16x32xf32>
    %33 = arith.mulf %31, %32 : vector<16x32xf32>
    %34 = vector.broadcast %3 : vector<1x32xf32> to vector<16x32xf32>
    %35 = arith.addf %33, %34 : vector<16x32xf32>
    %cst_10 = arith.constant 5.000000e-01 : f32
    %36 = vector.broadcast %cst_10 : f32 to vector<16x32xf32>
    %37 = arith.mulf %36, %35 : vector<16x32xf32>
    %cst_11 = arith.constant 0.707106769 : f32
    %38 = vector.broadcast %cst_11 : f32 to vector<16x32xf32>
    %39 = arith.mulf %35, %38 : vector<16x32xf32>
    %40 = math.erf %39 : vector<16x32xf32>
    %cst_12 = arith.constant 1.000000e+00 : f32
    %41 = vector.broadcast %cst_12 : f32 to vector<16x32xf32>
    %42 = arith.addf %41, %40 : vector<16x32xf32>
    %43 = arith.mulf %37, %42 : vector<16x32xf32>
    %c0_13 = arith.constant 0 : index
    %c0_14 = arith.constant 0 : index
    %44 = vector.load %arg5[%c0_13, %c0_14] : memref<32x32xf32, #tpu.memory_space<vmem>>, vector<32x32xf32>
    %cst_15 = arith.constant dense<0.000000e+00> : vector<16x32xf32>
    %45 = tpu.matmul %43, %44, %cst_15 {dimension_numbers = #tpu.dot_dimension_numbers<[1], [0], [0], [1], [0, 0, 1, 1], [], []>} : vector<16x32xf32>, vector<32x32xf32>, vector<16x32xf32> -> vector<16x32xf32>
    %46 = vector.broadcast %4 : vector<1x32xf32> to vector<16x32xf32>
    %47 = arith.addf %45, %46 : vector<16x32xf32>
    %cst_16 = arith.constant 5.000000e-01 : f32
    %48 = vector.broadcast %cst_16 : f32 to vector<16x32xf32>
    %49 = arith.mulf %48, %47 : vector<16x32xf32>
    %cst_17 = arith.constant 0.707106769 : f32
    %50 = vector.broadcast %cst_17 : f32 to vector<16x32xf32>
    %51 = arith.mulf %47, %50 : vector<16x32xf32>
    %52 = math.erf %51 : vector<16x32xf32>
    %cst_18 = arith.constant 1.000000e+00 : f32
    %53 = vector.broadcast %cst_18 : f32 to vector<16x32xf32>
    %54 = arith.addf %53, %52 : vector<16x32xf32>
    %55 = arith.mulf %49, %54 : vector<16x32xf32>
    %c0_19 = arith.constant 0 : index
    %c0_20 = arith.constant 0 : index
    %56 = vector.load %arg6[%c0_19, %c0_20] : memref<32x8xf32, #tpu.memory_space<vmem>>, vector<32x8xf32>
    %cst_21 = arith.constant dense<0.000000e+00> : vector<16x8xf32>
    %57 = tpu.matmul %55, %56, %cst_21 {dimension_numbers = #tpu.dot_dimension_numbers<[1], [0], [0], [1], [0, 0, 1, 1], [], []>} : vector<16x32xf32>, vector<32x8xf32>, vector<16x8xf32> -> vector<16x8xf32>
    %58 = vector.broadcast %8 : vector<1x8xf32> to vector<16x8xf32>
    %59 = arith.addf %57, %58 : vector<16x8xf32>
    %60 = vector.shape_cast %59 : vector<16x8xf32> to vector<2x8x8xf32>
    %c0_22 = arith.constant 0 : index
    %c0_23 = arith.constant 0 : index
    %61 = vector.load %arg2[%c0_22, %c0_23] : memref<2x8xf32, #tpu.memory_space<vmem>>, vector<2x8xf32>
    %62 = vector.shape_cast %61 : vector<2x8xf32> to vector<2x8x1xf32>
    %63 = vector.broadcast %62 : vector<2x8x1xf32> to vector<2x8x8xf32>
    %64 = arith.addf %60, %63 : vector<2x8x8xf32>
    %cst_24 = arith.constant dense<0xFF800000> : vector<2x8xf32>
    %65 = vector.multi_reduction <maximumf>, %64, %cst_24 [1] : vector<2x8x8xf32> to vector<2x8xf32>
    %66 = vector.shape_cast %65 : vector<2x8xf32> to vector<2x1x8xf32>
    %67 = vector.broadcast %66 : vector<2x1x8xf32> to vector<2x8x8xf32>
    %68 = arith.subf %64, %67 : vector<2x8x8xf32>
    %69 = math.exp %68 : vector<2x8x8xf32>
    %cst_25 = arith.constant dense<0.000000e+00> : vector<2x8xf32>
    %70 = vector.multi_reduction <add>, %69, %cst_25 [1] : vector<2x8x8xf32> to vector<2x8xf32>
    %71 = vector.shape_cast %70 : vector<2x8xf32> to vector<2x1x8xf32>
    %72 = vector.broadcast %71 : vector<2x1x8xf32> to vector<2x8x8xf32>
    %73 = arith.divf %69, %72 : vector<2x8x8xf32>
    %74 = vector.shape_cast %73 : vector<2x8x8xf32> to vector<16x8xf32>
    %c0_26 = arith.constant 0 : index
    %c0_27 = arith.constant 0 : index
    %75 = vector.load %arg3[%c0_26, %c0_27] : memref<8x32xf32, #tpu.memory_space<vmem>>, vector<8x32xf32>
    %cst_28 = arith.constant dense<0.000000e+00> : vector<16x32xf32>
    %76 = tpu.matmul %74, %75, %cst_28 {dimension_numbers = #tpu.dot_dimension_numbers<[1], [0], [0], [1], [0, 0, 1, 1], [], []>} : vector<16x8xf32>, vector<8x32xf32>, vector<16x32xf32> -> vector<16x32xf32>
    %77 = arith.mulf %76, %43 : vector<16x32xf32>
    %78 = vector.shape_cast %77 : vector<16x32xf32> to vector<2x8x32xf32>
    %cst_29 = arith.constant dense<0.000000e+00> : vector<2x32xf32>
    %79 = vector.multi_reduction <add>, %78, %cst_29 [1] : vector<2x8x32xf32> to vector<2x32xf32>
    %c0_30 = arith.constant 0 : index
    %c0_31 = arith.constant 0 : index
    %80 = vector.load %arg7[%c0_30, %c0_31] : memref<32x32xf32, #tpu.memory_space<vmem>>, vector<32x32xf32>
    %cst_32 = arith.constant dense<0.000000e+00> : vector<2x32xf32>
    %81 = tpu.matmul %79, %80, %cst_32 {dimension_numbers = #tpu.dot_dimension_numbers<[1], [0], [0], [1], [0, 0, 1, 1], [], []>} : vector<2x32xf32>, vector<32x32xf32>, vector<2x32xf32> -> vector<2x32xf32>
    %82 = vector.broadcast %5 : vector<1x32xf32> to vector<2x32xf32>
    %83 = arith.addf %81, %82 : vector<2x32xf32>
    %cst_33 = arith.constant dense<0.000000e+00> : vector<2xf32>
    %84 = vector.multi_reduction <add>, %83, %cst_33 [1] : vector<2x32xf32> to vector<2xf32>
    %85 = vector.shape_cast %84 : vector<2xf32> to vector<2x1xf32>
    %cst_34 = arith.constant 3.200000e+01 : f32
    %86 = vector.broadcast %cst_34 : f32 to vector<2x1xf32>
    %87 = arith.divf %85, %86 : vector<2x1xf32>
    %88 = vector.broadcast %87 : vector<2x1xf32> to vector<2x32xf32>
    %89 = arith.subf %83, %88 : vector<2x32xf32>
    %90 = arith.mulf %89, %89 : vector<2x32xf32>
    %cst_35 = arith.constant dense<0.000000e+00> : vector<2xf32>
    %91 = vector.multi_reduction <add>, %90, %cst_35 [1] : vector<2x32xf32> to vector<2xf32>
    %92 = vector.shape_cast %91 : vector<2xf32> to vector<2x1xf32>
    %cst_36 = arith.constant 3.200000e+01 : f32
    %93 = vector.broadcast %cst_36 : f32 to vector<2x1xf32>
    %94 = arith.divf %92, %93 : vector<2x1xf32>
    %95 = vector.broadcast %87 : vector<2x1xf32> to vector<2x32xf32>
    %96 = arith.subf %83, %95 : vector<2x32xf32>
    %cst_37 = arith.constant 9.99999974E-6 : f32
    %97 = vector.broadcast %cst_37 : f32 to vector<2x1xf32>
    %98 = arith.addf %94, %97 : vector<2x1xf32>
    %99 = math.rsqrt %98 : vector<2x1xf32>
    %100 = vector.broadcast %99 : vector<2x1xf32> to vector<2x32xf32>
    %101 = arith.mulf %96, %100 : vector<2x32xf32>
    %102 = vector.broadcast %6 : vector<1x32xf32> to vector<2x32xf32>
    %103 = arith.mulf %101, %102 : vector<2x32xf32>
    %104 = vector.broadcast %7 : vector<1x32xf32> to vector<2x32xf32>
    %105 = arith.addf %103, %104 : vector<2x32xf32>
    %cst_38 = arith.constant 5.000000e-01 : f32
    %106 = vector.broadcast %cst_38 : f32 to vector<2x32xf32>
    %107 = arith.mulf %106, %105 : vector<2x32xf32>
    %cst_39 = arith.constant 0.707106769 : f32
    %108 = vector.broadcast %cst_39 : f32 to vector<2x32xf32>
    %109 = arith.mulf %105, %108 : vector<2x32xf32>
    %110 = math.erf %109 : vector<2x32xf32>
    %cst_40 = arith.constant 1.000000e+00 : f32
    %111 = vector.broadcast %cst_40 : f32 to vector<2x32xf32>
    %112 = arith.addf %111, %110 : vector<2x32xf32>
    %113 = arith.mulf %107, %112 : vector<2x32xf32>
    %c0_41 = arith.constant 0 : index
    %c0_42 = arith.constant 0 : index
    %114 = vector.load %arg9[%c0_41, %c0_42] : memref<2x32xf32, #tpu.memory_space<vmem>>, vector<2x32xf32>
    tpu.vector_store %arg9[%c0_41, %c0_42], %113 {strides = array<i32>} : memref<2x32xf32, #tpu.memory_space<vmem>>, vector<2x32xf32>,
    return
  }
  func.func @transform_0(%arg0: i32) -> (i32, i32) {
    %c0_i32 = arith.constant 0 : i32
    %c0_i32_0 = arith.constant 0 : i32
    return %arg0, %c0_i32 : i32, i32
  }
  func.func @transform_1(%arg0: i32) -> (i32, i32) {
    %c0_i32 = arith.constant 0 : i32
    %c0_i32_0 = arith.constant 0 : i32
    return %arg0, %c0_i32 : i32, i32
  }
  func.func @transform_2(%arg0: i32) -> (i32, i32) {
    %c0_i32 = arith.constant 0 : i32
    %c0_i32_0 = arith.constant 0 : i32
    %c0_i32_1 = arith.constant 0 : i32
    return %c0_i32, %c0_i32_0 : i32, i32
  }
  func.func @transform_3(%arg0: i32) -> (i32, i32) {
    %c0_i32 = arith.constant 0 : i32
    %c0_i32_0 = arith.constant 0 : i32
    %c0_i32_1 = arith.constant 0 : i32
    return %c0_i32, %c0_i32_0 : i32, i32
  }
  func.func @transform_4(%arg0: i32) -> (i32, i32) {
    %c0_i32 = arith.constant 0 : i32
    %c0_i32_0 = arith.constant 0 : i32
    %c0_i32_1 = arith.constant 0 : i32
    return %c0_i32, %c0_i32_0 : i32, i32
  }
  func.func @transform_5(%arg0: i32) -> (i32, i32) {
    %c0_i32 = arith.constant 0 : i32
    %c0_i32_0 = arith.constant 0 : i32
    %c0_i32_1 = arith.constant 0 : i32
    return %c0_i32, %c0_i32_0 : i32, i32
  }
  func.func @transform_6(%arg0: i32) -> (i32, i32) {
    %c0_i32 = arith.constant 0 : i32
    %c0_i32_0 = arith.constant 0 : i32
    %c0_i32_1 = arith.constant 0 : i32
    return %c0_i32, %c0_i32_0 : i32, i32
  }
  func.func @transform_7(%arg0: i32) -> (i32, i32) {
    %c0_i32 = arith.constant 0 : i32
    %c0_i32_0 = arith.constant 0 : i32
    %c0_i32_1 = arith.constant 0 : i32
    return %c0_i32, %c0_i32_0 : i32, i32
  }
  func.func @transform_8(%arg0: i32) -> (i32, i32) {
    %c0_i32 = arith.constant 0 : i32
    %c0_i32_0 = arith.constant 0 : i32
    return %arg0, %c0_i32 : i32, i32
  }
}

</mosaic_0001>

<llo_original>
// kernel: tpu_custom_call.1
$region0: #{tpu_custom_call.1}
  #allocation0 [shape = 'u32[]', space=smem, size = 0x4, offset = 0x4, fixed_abs, tag = 'smem constant byte address 0x4 - core index']
  #allocation1 [shape = 'u32[144,128]{1,0:T(1,128)}', space=vmem, size = 0x12000, scoped, tag = 'internal scratch']
  %s0 = inlined_call_operand.vmem [shape: f32[16,16], index: 0, kind: input, shape index: {}]
  %s1 = inlined_call_operand.vmem [shape: f32[2,8], index: 1, kind: input, shape index: {}]
  %s2 = inlined_call_operand.hbm [shape: f32[8,32], index: 2, kind: input, shape index: {}]
  %s3 = inlined_call_operand.hbm [shape: f32[16,32], index: 3, kind: input, shape index: {}]
  %s4 = inlined_call_operand.vmem [shape: f32[32,32], index: 4, kind: input, shape index: {}]
  %s5 = inlined_call_operand.vmem [shape: f32[32,8], index: 5, kind: input, shape index: {}]
  %s6 = inlined_call_operand.hbm [shape: f32[32,32], index: 6, kind: input, shape index: {}]
  %s7 = inlined_call_operand.vmem [shape: f32[8,32], index: 7, kind: input, shape index: {}]
  %s8 = inlined_call_operand.hbm [shape: f32[2,32], index: 8, kind: output, shape index: {}]
  %s9 = sld [smem:[#allocation0]]
  $region54: #{tpu_custom_call.1} parent=0
    _
  %s11 = ssub.s32 1, %s9
  %s12 = scalar_select 0, %s11, %s9
  $region1: #{tpu_custom_call.1} parent=0
    #allocation2 [shape = 'u8[4096]{0}', space=vmem, size = 0x1000, scoped, tag = 'input window, operand 2, single buffered']
    #allocation3 [shape = 's32[1]{0}', space=sflag, size = 0x4, scoped, tag = 'scoped memory for tpu_custom_call.1']
    #allocation4 [shape = 's32[1]{0}', space=sflag, size = 0x4, scoped, tag = 'scoped memory for tpu_custom_call.1']
    #allocation5 [shape = 'u8[8192]{0}', space=vmem, size = 0x2000, scoped, tag = 'input window, operand 3, single buffered']
    #allocation6 [shape = 's32[1]{0}', space=sflag, size = 0x4, scoped, tag = 'scoped memory for tpu_custom_call.1']
    #allocation7 [shape = 'u8[16384]{0}', space=vmem, size = 0x4000, scoped, tag = 'input window, operand 6, single buffered']
    #allocation8 [shape = 'u8[1024]{0}', space=vmem, size = 0x400, scoped, tag = 'output window, operand 0, single buffered']
    %13 = vsyncpa [#allocation3], 0
    %14 = vsyncpa [#allocation6], 0
    %15 = vsyncpa [#allocation4], 0
    // Predicated region
    $region2: #{tpu_custom_call.1} parent=1 // pred_check
      _
    $region3: #{tpu_custom_call.1} parent=1 // pred_check_branch
      %17 = sbr.rel (0) target = $region5
    $region4: #{tpu_custom_call.1} parent=1 // pred_region
      _
    $region5: #{tpu_custom_call.1} parent=1 // pred_fallthru
      _
    // Predicated region
    $region6: #{tpu_custom_call.1} parent=1 // pred_check
      _
    $region7: #{tpu_custom_call.1} parent=1 // pred_check_branch
      %19 = sbr.rel (0) target = $region9
    $region8: #{tpu_custom_call.1} parent=1 // pred_region
      _
    $region9: #{tpu_custom_call.1} parent=1 // pred_fallthru
      _
    // Predicated region
    $region10: #{tpu_custom_call.1} parent=1 // pred_check
      _
    $region11: #{tpu_custom_call.1} parent=1 // pred_check_branch
      %21 = sbr.rel (0) target = $region13
    $region12: #{tpu_custom_call.1} parent=1 // pred_region
      %s23 = ssub.s32 128, 128
      %24 = vsyncadd [#allocation3], %s23
      %s26 = sshll.u32 [#allocation2], 4
      %s27 = int_to_ptr.vmem [resolvable:$true] %s26
      %29 = dma.hbm_to_vmem [thread:$0]  %s2, 128, %s27, [#allocation3]
    $region13: #{tpu_custom_call.1} parent=1 // pred_fallthru
      _
    // Predicated region
    $region14: #{tpu_custom_call.1} parent=1 // pred_check
      _
    $region15: #{tpu_custom_call.1} parent=1 // pred_check_branch
      %31 = sbr.rel (0) target = $region17
    $region16: #{tpu_custom_call.1} parent=1 // pred_region
      %s33 = ssub.s32 256, 256
      %34 = vsyncadd [#allocation6], %s33
      %s35 = sshll.u32 [#allocation5], 4
      %s36 = int_to_ptr.vmem [resolvable:$true] %s35
      %41 = dma.hbm_to_vmem [thread:$0]  %s3, 256, %s36, [#allocation6], 128, 128, 8
    $region17: #{tpu_custom_call.1} parent=1 // pred_fallthru
      _
    // Predicated region
    $region18: #{tpu_custom_call.1} parent=1 // pred_check
      _
    $region19: #{tpu_custom_call.1} parent=1 // pred_check_branch
      %43 = sbr.rel (0) target = $region21
    $region20: #{tpu_custom_call.1} parent=1 // pred_region
      _
    $region21: #{tpu_custom_call.1} parent=1 // pred_fallthru
      _
    // Predicated region
    $region22: #{tpu_custom_call.1} parent=1 // pred_check
      _
    $region23: #{tpu_custom_call.1} parent=1 // pred_check_branch
      %45 = sbr.rel (0) target = $region25
    $region24: #{tpu_custom_call.1} parent=1 // pred_region
      _
    $region25: #{tpu_custom_call.1} parent=1 // pred_fallthru
      _
    // Predicated region
    $region26: #{tpu_custom_call.1} parent=1 // pred_check
      _
    $region27: #{tpu_custom_call.1} parent=1 // pred_check_branch
      %47 = sbr.rel (0) target = $region29
    $region28: #{tpu_custom_call.1} parent=1 // pred_region
      %s49 = ssub.s32 512, 512
      %50 = vsyncadd [#allocation6], %s49
      %s51 = sshll.u32 [#allocation7], 4
      %s52 = int_to_ptr.vmem [resolvable:$true] %s51
      %57 = dma.hbm_to_vmem [thread:$0]  %s6, 512, %s52, [#allocation6], 128, 128, 8
    $region29: #{tpu_custom_call.1} parent=1 // pred_fallthru
      _
    // Predicated region
    $region30: #{tpu_custom_call.1} parent=1 // pred_check
      _
    $region31: #{tpu_custom_call.1} parent=1 // pred_check_branch
      %59 = sbr.rel (0) target = $region33
    $region32: #{tpu_custom_call.1} parent=1 // pred_region
      _
    $region33: #{tpu_custom_call.1} parent=1 // pred_fallthru
      _
    // Predicated region
    $region34: #{tpu_custom_call.1} parent=1 // pred_check
      _
    $region35: #{tpu_custom_call.1} parent=1 // pred_check_branch
      %61 = sbr.rel (0) target = $region37
    $region36: #{tpu_custom_call.1} parent=1 // pred_region
      %62 = dma.done [#allocation3], 128
    $region37: #{tpu_custom_call.1} parent=1 // pred_fallthru
      _
    // Predicated region
    $region38: #{tpu_custom_call.1} parent=1 // pred_check
      _
    $region39: #{tpu_custom_call.1} parent=1 // pred_check_branch
      %64 = sbr.rel (0) target = $region41
    $region40: #{tpu_custom_call.1} parent=1 // pred_region
      %65 = dma.done [#allocation6], 256
    $region41: #{tpu_custom_call.1} parent=1 // pred_fallthru
      _
    // Predicated region
    $region42: #{tpu_custom_call.1} parent=1 // pred_check
      _
    $region43: #{tpu_custom_call.1} parent=1 // pred_check_branch
      %67 = sbr.rel (0) target = $region45
    $region44: #{tpu_custom_call.1} parent=1 // pred_region
      %68 = dma.done [#allocation6], 512
    $region45: #{tpu_custom_call.1} parent=1 // pred_fallthru
      _
    %v69 = vld [vmem:[%s7] sm:$0xff]
    %v70 = vld [vmem:[%s0] sm:$0xff]
    %v71 = vld [vmem:[%s0 + $0x8] sm:$0xff]
    %v72 = vld [vmem:[#allocation5] sm:$0xff]
    %v73 = vld [vmem:[#allocation5 + $0x8] sm:$0xff]
    %v74 = vlaneseq
    %v75 = vshrl.u32 %v74, 7
    %v76 = vsub.s32 0, %v75
    %v77 = vrot.slane %v69, %v76
    %vm78 = vcmask 130048
    %v80 = vsel %vm78, %v70, 0
    %v83 = vsel %vm78, %v71, 0
    %85 = vmatprep.subr.mxu0 0.0
    %86 = vmatpush1.msra.mxu0 %v72
    %87 = vmatprep.subr.mxu0 0.0
    %88 = vmatpush1.msra.mxu0 %v73
    %89 = vmatprep.subr.mxu0 0.0
    %90 = vmatpush1.msra.mxu0 0.0
    %91 = vmatprep.subr.mxu0 0.0
    %92 = vmatpush1.msra.mxu0 0.0
    %93 = vmatprep.subr.mxu0 0.0
    %94 = vmatpush1.msra.mxu0 0.0
    %95 = vmatprep.subr.mxu0 0.0
    %96 = vmatpush1.msra.mxu0 0.0
    %97 = vmatprep.subr.mxu0 0.0
    %98 = vmatpush1.msra.mxu0 0.0
    %99 = vmatprep.subr.mxu0 0.0
    %100 = vmatpush1.msra.mxu0 0.0
    %101 = vmatprep.subr.mxu0 0.0
    %102 = vmatpush1.msra.mxu0 0.0
    %103 = vmatprep.subr.mxu0 0.0
    %104 = vmatpush1.msra.mxu0 0.0
    %105 = vmatprep.subr.mxu0 0.0
    %106 = vmatpush1.msra.mxu0 0.0
    %107 = vmatprep.subr.mxu0 0.0
    %108 = vmatpush1.msra.mxu0 0.0
    %109 = vmatprep.subr.mxu0 0.0
    %110 = vmatpush1.msra.mxu0 0.0
    %111 = vmatprep.subr.mxu0 0.0
    %112 = vmatpush1.msra.mxu0 0.0
    %113 = vmatprep.subr.mxu0 0.0
    %114 = vmatpush1.msra.mxu0 0.0
    %115 = vmatprep.subr.mxu0 0.0
    %116 = vmatpush1.msra.mxu0 0.0
    %117 = vmatprep.subr.mxu0 0.0
    %118 = vmatpush1.msra.mxu0 0.0
    %119 = vmatprep.subr.mxu0 0.0
    %120 = vmatpush1.msra.mxu0 0.0
    %121 = vmatprep.subr.mxu0 0.0
    %122 = vmatpush1.msra.mxu0 0.0
    %123 = vmatprep.subr.mxu0 0.0
    %124 = vmatpush1.msra.mxu0 0.0
    %125 = vmatprep.subr.mxu0 0.0
    %126 = vmatpush1.msra.mxu0 0.0
    %127 = vmatprep.subr.mxu0 0.0
    %128 = vmatpush1.msra.mxu0 0.0
    %129 = vmatprep.subr.mxu0 0.0
    %130 = vmatpush1.msra.mxu0 0.0
    %131 = vmatprep.subr.mxu0 0.0
    %132 = vmatpush1.msra.mxu0 0.0
    %133 = vmatprep.subr.mxu0 0.0
    %134 = vmatpush1.msra.mxu0 0.0
    %135 = vmatprep.subr.mxu0 0.0
    %136 = vmatpush1.msra.mxu0 0.0
    %137 = vmatprep.subr.mxu0 0.0
    %138 = vmatpush1.msra.mxu0 0.0
    %139 = vmatprep.subr.mxu0 0.0
    %140 = vmatpush1.msra.mxu0 0.0
    %141 = vmatprep.subr.mxu0 0.0
    %142 = vmatpush1.msra.mxu0 0.0
    %143 = vmatprep.subr.mxu0 0.0
    %144 = vmatpush1.msra.mxu0 0.0
    %145 = vmatprep.subr.mxu0 0.0
    %146 = vmatpush1.msra.mxu0 0.0
    %147 = vmatprep.subr.mxu0 0.0
    %148 = vmatpush1.msra.mxu0 0.0
    %149 = vmatprep.mubr.f32.mxu0 0.0
    %150 = vmatmul.mubr.f32.gmra.mrb[0].mxu0 %v80
    %v151 = vpop.f32.mrb[0].mxu0
    %v152 = vadd.f32 %v77, %v151
    %v153 = vpop.f32.mrb[0].mxu0
    %154 = vmatprep.mubr.f32.mxu0 0.0
    %155 = vmatmul.mubr.f32.gmra.mrb[0].mxu0 %v83
    %v156 = vpop.f32.mrb[0].mxu0
    %v157 = vadd.f32 %v77, %v156
    %v158 = vpop.f32.mrb[0].mxu0
    %159 = vdwg.mxu0
    %vm160 = vcmask 261120
    %v161 = vsel %vm160, %v152, 0.0
    %162 = vadd.xlane.f32.xlu0 %v161
    %v163 = vpop.xlane.xlu0 %162
    %v164 = vsel %vm160, %v157, 0.0
    %165 = vadd.xlane.f32.xlu0 %v164
    %v166 = vpop.xlane.xlu0 %165
    %v167 = vrcp.pop 32.0
    %v168 = vmul.f32 %v163, %v167
    %v169 = vmul.f32 %v166, %v167
    %v170 = vsub.f32 %v152, %v168
    %v171 = vsub.f32 %v157, %v169
    %v172 = vmul.f32 %v170, %v170
    %v173 = vmul.f32 %v171, %v171
    %v174 = vsel %vm160, %v172, 0.0
    %175 = vadd.xlane.f32.xlu0 %v174
    %v176 = vpop.xlane.xlu0 %175
    %v177 = vsel %vm160, %v173, 0.0
    %178 = vadd.xlane.f32.xlu0 %v177
    %v179 = vpop.xlane.xlu0 %178
    %v180 = vmul.f32 %v176, %v167
    %v181 = vmul.f32 %v179, %v167
    %v182 = vadd.f32 %v180, 1e-05
    %v183 = vadd.f32 %v181, 1e-05
    %v184 = vrsqrt.pop %v182
    %v185 = vrsqrt.pop %v183
    %v186 = vmul.f32 %v170, %v184
    %v187 = vmul.f32 %v171, %v185
    %v188 = vlaneseq
    %v189 = vshrl.u32 %v188, 7
    %v190 = vsub.s32 1, %v189
    %v191 = vrot.slane %v69, %v190
    %v192 = vmul.f32 %v186, %v191
    %v193 = vmul.f32 %v187, %v191
    %v194 = vlaneseq
    %v195 = vshrl.u32 %v194, 7
    %v196 = vsub.s32 2, %v195
    %v197 = vrot.slane %v69, %v196
    %v198 = vadd.f32 %v192, %v197
    %v199 = vadd.f32 %v193, %v197
    %v200 = vmul.f32 %v198, 0.5
    %v201 = vmul.f32 %v199, 0.5
    %v202 = vmul.f32 %v198, 0.70710677
    %v203 = vmul.f32 %v199, 0.70710677
    %v204 = verf.f32.pop %v202
    %v205 = verf.f32.pop %v203
    %v206 = vadd.f32 %v204, 1.0
    %v207 = vadd.f32 %v205, 1.0
    %v208 = vmul.f32 %v200, %v206
    %v209 = vmul.f32 %v201, %v207
    %v210 = vld [vmem:[%s4] sm:$0xff]
    %v211 = vld [vmem:[%s4 + $0x8] sm:$0xff]
    %v212 = vld [vmem:[%s4 + $0x10] sm:$0xff]
    %v213 = vld [vmem:[%s4 + $0x18] sm:$0xff]
    %v214 = vlaneseq
    %v215 = vshrl.u32 %v214, 7
    %v216 = vsub.s32 3, %v215
    %v217 = vrot.slane %v69, %v216
    %v219 = vsel %vm160, %v208, 0
    %v222 = vsel %vm160, %v209, 0
    %224 = vmatprep.subr.mxu0 0.0
    %225 = vmatpush1.msra.mxu0 %v210
    %226 = vmatprep.subr.mxu0 0.0
    %227 = vmatpush1.msra.mxu0 %v211
    %228 = vmatprep.subr.mxu0 0.0
    %229 = vmatpush1.msra.mxu0 %v212
    %230 = vmatprep.subr.mxu0 0.0
    %231 = vmatpush1.msra.mxu0 %v213
    %232 = vmatprep.subr.mxu0 0.0
    %233 = vmatpush1.msra.mxu0 0.0
    %234 = vmatprep.subr.mxu0 0.0
    %235 = vmatpush1.msra.mxu0 0.0
    %236 = vmatprep.subr.mxu0 0.0
    %237 = vmatpush1.msra.mxu0 0.0
    %238 = vmatprep.subr.mxu0 0.0
    %239 = vmatpush1.msra.mxu0 0.0
    %240 = vmatprep.subr.mxu0 0.0
    %241 = vmatpush1.msra.mxu0 0.0
    %242 = vmatprep.subr.mxu0 0.0
    %243 = vmatpush1.msra.mxu0 0.0
    %244 = vmatprep.subr.mxu0 0.0
    %245 = vmatpush1.msra.mxu0 0.0
    %246 = vmatprep.subr.mxu0 0.0
    %247 = vmatpush1.msra.mxu0 0.0
    %248 = vmatprep.subr.mxu0 0.0
    %249 = vmatpush1.msra.mxu0 0.0
    %250 = vmatprep.subr.mxu0 0.0
    %251 = vmatpush1.msra.mxu0 0.0
    %252 = vmatprep.subr.mxu0 0.0
    %253 = vmatpush1.msra.mxu0 0.0
    %254 = vmatprep.subr.mxu0 0.0
    %255 = vmatpush1.msra.mxu0 0.0
    %256 = vmatprep.subr.mxu0 0.0
    %257 = vmatpush1.msra.mxu0 0.0
    %258 = vmatprep.subr.mxu0 0.0
    %259 = vmatpush1.msra.mxu0 0.0
    %260 = vmatprep.subr.mxu0 0.0
    %261 = vmatpush1.msra.mxu0 0.0
    %262 = vmatprep.subr.mxu0 0.0
    %263 = vmatpush1.msra.mxu0 0.0
    %264 = vmatprep.subr.mxu0 0.0
    %265 = vmatpush1.msra.mxu0 0.0
    %266 = vmatprep.subr.mxu0 0.0
    %267 = vmatpush1.msra.mxu0 0.0
    %268 = vmatprep.subr.mxu0 0.0
    %269 = vmatpush1.msra.mxu0 0.0
    %270 = vmatprep.subr.mxu0 0.0
    %271 = vmatpush1.msra.mxu0 0.0
    %272 = vmatprep.subr.mxu0 0.0
    %273 = vmatpush1.msra.mxu0 0.0
    %274 = vmatprep.subr.mxu0 0.0
    %275 = vmatpush1.msra.mxu0 0.0
    %276 = vmatprep.subr.mxu0 0.0
    %277 = vmatpush1.msra.mxu0 0.0
    %278 = vmatprep.subr.mxu0 0.0
    %279 = vmatpush1.msra.mxu0 0.0
    %280 = vmatprep.subr.mxu0 0.0
    %281 = vmatpush1.msra.mxu0 0.0
    %282 = vmatprep.subr.mxu0 0.0
    %283 = vmatpush1.msra.mxu0 0.0
    %284 = vmatprep.subr.mxu0 0.0
    %285 = vmatpush1.msra.mxu0 0.0
    %286 = vmatprep.subr.mxu0 0.0
    %287 = vmatpush1.msra.mxu0 0.0
    %288 = vmatprep.mubr.f32.mxu0 0.0
    %289 = vmatmul.mubr.f32.gmra.mrb[0].mxu0 %v219
    %v290 = vpop.f32.mrb[0].mxu0
    %v291 = vadd.f32 %v217, %v290
    %v292 = vpop.f32.mrb[0].mxu0
    %293 = vmatprep.mubr.f32.mxu0 0.0
    %294 = vmatmul.mubr.f32.gmra.mrb[0].mxu0 %v222
    %v295 = vpop.f32.mrb[0].mxu0
    %v296 = vadd.f32 %v217, %v295
    %v297 = vpop.f32.mrb[0].mxu0
    %298 = vdwg.mxu0
    %v299 = vmul.f32 %v291, 0.5
    %v300 = vmul.f32 %v296, 0.5
    %v301 = vmul.f32 %v291, 0.70710677
    %v302 = vmul.f32 %v296, 0.70710677
    %v303 = verf.f32.pop %v301
    %v304 = verf.f32.pop %v302
    %v305 = vadd.f32 %v303, 1.0
    %v306 = vadd.f32 %v304, 1.0
    %v307 = vmul.f32 %v299, %v305
    %v308 = vmul.f32 %v300, %v306
    %v309 = vld [vmem:[%s5] sm:$0xff]
    %v310 = vld [vmem:[%s5 + $0x8] sm:$0xff]
    %v311 = vld [vmem:[%s5 + $0x10] sm:$0xff]
    %v312 = vld [vmem:[%s5 + $0x18] sm:$0xff]
    %v313 = vlaneseq
    %v314 = vshrl.u32 %v313, 7
    %v315 = vsub.s32 7, %v314
    %v316 = vrot.slane %v69, %v315
    %v318 = vsel %vm160, %v307, 0
    %v321 = vsel %vm160, %v308, 0
    %323 = vmatprep.subr.mxu0 0.0
    %324 = vmatpush1.msra.mxu0 %v309
    %325 = vmatprep.subr.mxu0 0.0
    %326 = vmatpush1.msra.mxu0 %v310
    %327 = vmatprep.subr.mxu0 0.0
    %328 = vmatpush1.msra.mxu0 %v311
    %329 = vmatprep.subr.mxu0 0.0
    %330 = vmatpush1.msra.mxu0 %v312
    %331 = vmatprep.subr.mxu0 0.0
    %332 = vmatpush1.msra.mxu0 0.0
    %333 = vmatprep.subr.mxu0 0.0
    %334 = vmatpush1.msra.mxu0 0.0
    %335 = vmatprep.subr.mxu0 0.0
    %336 = vmatpush1.msra.mxu0 0.0
    %337 = vmatprep.subr.mxu0 0.0
    %338 = vmatpush1.msra.mxu0 0.0
    %339 = vmatprep.subr.mxu0 0.0
    %340 = vmatpush1.msra.mxu0 0.0
    %341 = vmatprep.subr.mxu0 0.0
    %342 = vmatpush1.msra.mxu0 0.0
    %343 = vmatprep.subr.mxu0 0.0
    %344 = vmatpush1.msra.mxu0 0.0
    %345 = vmatprep.subr.mxu0 0.0
    %346 = vmatpush1.msra.mxu0 0.0
    %347 = vmatprep.subr.mxu0 0.0
    %348 = vmatpush1.msra.mxu0 0.0
    %349 = vmatprep.subr.mxu0 0.0
    %350 = vmatpush1.msra.mxu0 0.0
    %351 = vmatprep.subr.mxu0 0.0
    %352 = vmatpush1.msra.mxu0 0.0
    %353 = vmatprep.subr.mxu0 0.0
    %354 = vmatpush1.msra.mxu0 0.0
    %355 = vmatprep.subr.mxu0 0.0
    %356 = vmatpush1.msra.mxu0 0.0
    %357 = vmatprep.subr.mxu0 0.0
    %358 = vmatpush1.msra.mxu0 0.0
    %359 = vmatprep.subr.mxu0 0.0
    %360 = vmatpush1.msra.mxu0 0.0
    %361 = vmatprep.subr.mxu0 0.0
    %362 = vmatpush1.msra.mxu0 0.0
    %363 = vmatprep.subr.mxu0 0.0
    %364 = vmatpush1.msra.mxu0 0.0
    %365 = vmatprep.subr.mxu0 0.0
    %366 = vmatpush1.msra.mxu0 0.0
    %367 = vmatprep.subr.mxu0 0.0
    %368 = vmatpush1.msra.mxu0 0.0
    %369 = vmatprep.subr.mxu0 0.0
    %370 = vmatpush1.msra.mxu0 0.0
    %371 = vmatprep.subr.mxu0 0.0
    %372 = vmatpush1.msra.mxu0 0.0
    %373 = vmatprep.subr.mxu0 0.0
    %374 = vmatpush1.msra.mxu0 0.0
    %375 = vmatprep.subr.mxu0 0.0
    %376 = vmatpush1.msra.mxu0 0.0
    %377 = vmatprep.subr.mxu0 0.0
    %378 = vmatpush1.msra.mxu0 0.0
    %379 = vmatprep.subr.mxu0 0.0
    %380 = vmatpush1.msra.mxu0 0.0
    %381 = vmatprep.subr.mxu0 0.0
    %382 = vmatpush1.msra.mxu0 0.0
    %383 = vmatprep.subr.mxu0 0.0
    %384 = vmatpush1.msra.mxu0 0.0
    %385 = vmatprep.subr.mxu0 0.0
    %386 = vmatpush1.msra.mxu0 0.0
    %387 = vmatprep.mubr.f32.mxu0 0.0
    %388 = vmatmul.mubr.f32.gmra.mrb[0].mxu0 %v318
    %v389 = vpop.f32.mrb[0].mxu0
    %v390 = vadd.f32 %v316, %v389
    %v391 = vpop.f32.mrb[0].mxu0
    %392 = vmatprep.mubr.f32.mxu0 0.0
    %393 = vmatmul.mubr.f32.gmra.mrb[0].mxu0 %v321
    %v394 = vpop.f32.mrb[0].mxu0
    %v395 = vadd.f32 %v316, %v394
    %v396 = vpop.f32.mrb[0].mxu0
    %397 = vdwg.mxu0
    %v398 = vld [vmem:[%s1] sm:$0x3]
    %v399 = vlaneseq
    %v400 = vshrl.u32 %v399, 7
    %v401 = vsub.s32 0, %v400
    %v402 = vrot.slane %v398, %v401
    %404 = vbcast.lane.b32.xlu0 %v402, 256
    %v405 = vpop.permute.xlu0 %404
    %v406 = vlaneseq
    %v407 = vshrl.u32 %v406, 7
    %v408 = vsub.s32 1, %v407
    %v409 = vrot.slane %v398, %v408
    %411 = vbcast.lane.b32.xlu0 %v409, 256
    %v412 = vpop.permute.xlu0 %411
    %v413 = vadd.f32 %v390, %v405
    %v414 = vadd.f32 %v395, %v412
    %vm415 = vcmask 64512
    %v416 = vsel %vm415, %v413, -inf
    %v417 = vrot.slane %v416, 4
    %v418 = vmax.f32 %v416, %v417
    %v419 = vrot.slane %v418, 2
    %v420 = vmax.f32 %v418, %v419
    %v421 = vrot.slane %v420, 1
    %v422 = vmax.f32 %v420, %v421
    %v423 = vsel %vm415, %v414, -inf
    %v424 = vrot.slane %v423, 4
    %v425 = vmax.f32 %v423, %v424
    %v426 = vrot.slane %v425, 2
    %v427 = vmax.f32 %v425, %v426
    %v428 = vrot.slane %v427, 1
    %v429 = vmax.f32 %v427, %v428
    %v430 = vsub.f32 %v413, %v422
    %v431 = vsub.f32 %v414, %v429
    %v432 = vmul.f32 %v430, 1.442695
    %v433 = vpow.pop %v432
    %v434 = vmul.f32 %v431, 1.442695
    %v435 = vpow.pop %v434
    %v436 = vsel %vm415, %v433, 0.0
    %v437 = vrot.slane %v436, 4
    %v438 = vadd.f32 %v436, %v437
    %v439 = vrot.slane %v438, 2
    %v440 = vadd.f32 %v438, %v439
    %v441 = vrot.slane %v440, 1
    %v442 = vadd.f32 %v440, %v441
    %v443 = vsel %vm415, %v435, 0.0
    %v444 = vrot.slane %v443, 4
    %v445 = vadd.f32 %v443, %v444
    %v446 = vrot.slane %v445, 2
    %v447 = vadd.f32 %v445, %v446
    %v448 = vrot.slane %v447, 1
    %v449 = vadd.f32 %v447, %v448
    %v450 = vrcp.pop %v442
    %v451 = vmul.f32 %v433, %v450
    %v452 = vrcp.pop %v449
    %v453 = vmul.f32 %v435, %v452
    %v454 = vld [vmem:[#allocation2] sm:$0xff]
    %v456 = vsel %vm415, %v451, 0
    %v459 = vsel %vm415, %v453, 0
    %461 = vmatprep.subr.mxu0 0.0
    %462 = vmatpush1.msra.mxu0 %v454
    %463 = vmatprep.subr.mxu0 0.0
    %464 = vmatpush1.msra.mxu0 0.0
    %465 = vmatprep.subr.mxu0 0.0
    %466 = vmatpush1.msra.mxu0 0.0
    %467 = vmatprep.subr.mxu0 0.0
    %468 = vmatpush1.msra.mxu0 0.0
    %469 = vmatprep.subr.mxu0 0.0
    %470 = vmatpush1.msra.mxu0 0.0
    %471 = vmatprep.subr.mxu0 0.0
    %472 = vmatpush1.msra.mxu0 0.0
    %473 = vmatprep.subr.mxu0 0.0
    %474 = vmatpush1.msra.mxu0 0.0
    %475 = vmatprep.subr.mxu0 0.0
    %476 = vmatpush1.msra.mxu0 0.0
    %477 = vmatprep.subr.mxu0 0.0
    %478 = vmatpush1.msra.mxu0 0.0
    %479 = vmatprep.subr.mxu0 0.0
    %480 = vmatpush1.msra.mxu0 0.0
    %481 = vmatprep.subr.mxu0 0.0
    %482 = vmatpush1.msra.mxu0 0.0
    %483 = vmatprep.subr.mxu0 0.0
    %484 = vmatpush1.msra.mxu0 0.0
    %485 = vmatprep.subr.mxu0 0.0
    %486 = vmatpush1.msra.mxu0 0.0
    %487 = vmatprep.subr.mxu0 0.0
    %488 = vmatpush1.msra.mxu0 0.0
    %489 = vmatprep.subr.mxu0 0.0
    %490 = vmatpush1.msra.mxu0 0.0
    %491 = vmatprep.subr.mxu0 0.0
    %492 = vmatpush1.msra.mxu0 0.0
    %493 = vmatprep.subr.mxu0 0.0
    %494 = vmatpush1.msra.mxu0 0.0
    %495 = vmatprep.subr.mxu0 0.0
    %496 = vmatpush1.msra.mxu0 0.0
    %497 = vmatprep.subr.mxu0 0.0
    %498 = vmatpush1.msra.mxu0 0.0
    %499 = vmatprep.subr.mxu0 0.0
    %500 = vmatpush1.msra.mxu0 0.0
    %501 = vmatprep.subr.mxu0 0.0
    %502 = vmatpush1.msra.mxu0 0.0
    %503 = vmatprep.subr.mxu0 0.0
    %504 = vmatpush1.msra.mxu0 0.0
    %505 = vmatprep.subr.mxu0 0.0
    %506 = vmatpush1.msra.mxu0 0.0
    %507 = vmatprep.subr.mxu0 0.0
    %508 = vmatpush1.msra.mxu0 0.0
    %509 = vmatprep.subr.mxu0 0.0
    %510 = vmatpush1.msra.mxu0 0.0
    %511 = vmatprep.subr.mxu0 0.0
    %512 = vmatpush1.msra.mxu0 0.0
    %513 = vmatprep.subr.mxu0 0.0
    %514 = vmatpush1.msra.mxu0 0.0
    %515 = vmatprep.subr.mxu0 0.0
    %516 = vmatpush1.msra.mxu0 0.0
    %517 = vmatprep.subr.mxu0 0.0
    %518 = vmatpush1.msra.mxu0 0.0
    %519 = vmatprep.subr.mxu0 0.0
    %520 = vmatpush1.msra.mxu0 0.0
    %521 = vmatprep.subr.mxu0 0.0
    %522 = vmatpush1.msra.mxu0 0.0
    %523 = vmatprep.subr.mxu0 0.0
    %524 = vmatpush1.msra.mxu0 0.0
    %525 = vmatprep.mubr.f32.mxu0 0.0
    %526 = vmatmul.mubr.f32.gmra.mrb[0].mxu0 %v456
    %v527 = vpop.f32.mrb[0].mxu0
    %v528 = vadd.f32 0.0, %v527
    %v529 = vpop.f32.mrb[0].mxu0
    %530 = vmatprep.mubr.f32.mxu0 0.0
    %531 = vmatmul.mubr.f32.gmra.mrb[0].mxu0 %v459
    %v532 = vpop.f32.mrb[0].mxu0
    %v533 = vadd.f32 0.0, %v532
    %v534 = vpop.f32.mrb[0].mxu0
    %535 = vdwg.mxu0
    %v536 = vmul.f32 %v528, %v208
    %v537 = vmul.f32 %v533, %v209
    %v538 = vsel %vm160, %v536, 0.0
    %v539 = vrot.slane %v538, 4
    %v540 = vadd.f32 %v538, %v539
    %v541 = vrot.slane %v540, 2
    %v542 = vadd.f32 %v540, %v541
    %v543 = vrot.slane %v542, 1
    %v544 = vadd.f32 %v542, %v543
    %v545 = vsel %vm160, %v537, 0.0
    %v546 = vrot.slane %v545, 4
    %v547 = vadd.f32 %v545, %v546
    %v548 = vrot.slane %v547, 2
    %v549 = vadd.f32 %v547, %v548
    %v550 = vrot.slane %v549, 1
    %v551 = vadd.f32 %v549, %v550
    %v552 = vld [vmem:[#allocation7] sm:$0xff]
    %v553 = vld [vmem:[#allocation7 + $0x8] sm:$0xff]
    %v554 = vld [vmem:[#allocation7 + $0x10] sm:$0xff]
    %v555 = vld [vmem:[#allocation7 + $0x18] sm:$0xff]
    %v556 = vlaneseq
    %v557 = vshrl.u32 %v556, 7
    %v558 = vsub.s32 4, %v557
    %v559 = vrot.slane %v69, %v558
    %vm562 = vcmask 1041409
    %v563 = vsel %vm562, %v551, %v544
    %v564 = vsel %vm160, %v563, 0
    %566 = vmatprep.subr.mxu0 0.0
    %567 = vmatpush1.msra.mxu0 %v552
    %568 = vmatprep.subr.mxu0 0.0
    %569 = vmatpush1.msra.mxu0 %v553
    %570 = vmatprep.subr.mxu0 0.0
    %571 = vmatpush1.msra.mxu0 %v554
    %572 = vmatprep.subr.mxu0 0.0
    %573 = vmatpush1.msra.mxu0 %v555
    %574 = vmatprep.subr.mxu0 0.0
    %575 = vmatpush1.msra.mxu0 0.0
    %576 = vmatprep.subr.mxu0 0.0
    %577 = vmatpush1.msra.mxu0 0.0
    %578 = vmatprep.subr.mxu0 0.0
    %579 = vmatpush1.msra.mxu0 0.0
    %580 = vmatprep.subr.mxu0 0.0
    %581 = vmatpush1.msra.mxu0 0.0
    %582 = vmatprep.subr.mxu0 0.0
    %583 = vmatpush1.msra.mxu0 0.0
    %584 = vmatprep.subr.mxu0 0.0
    %585 = vmatpush1.msra.mxu0 0.0
    %586 = vmatprep.subr.mxu0 0.0
    %587 = vmatpush1.msra.mxu0 0.0
    %588 = vmatprep.subr.mxu0 0.0
    %589 = vmatpush1.msra.mxu0 0.0
    %590 = vmatprep.subr.mxu0 0.0
    %591 = vmatpush1.msra.mxu0 0.0
    %592 = vmatprep.subr.mxu0 0.0
    %593 = vmatpush1.msra.mxu0 0.0
    %594 = vmatprep.subr.mxu0 0.0
    %595 = vmatpush1.msra.mxu0 0.0
    %596 = vmatprep.subr.mxu0 0.0
    %597 = vmatpush1.msra.mxu0 0.0
    %598 = vmatprep.subr.mxu0 0.0
    %599 = vmatpush1.msra.mxu0 0.0
    %600 = vmatprep.subr.mxu0 0.0
    %601 = vmatpush1.msra.mxu0 0.0
    %602 = vmatprep.subr.mxu0 0.0
    %603 = vmatpush1.msra.mxu0 0.0
    %604 = vmatprep.subr.mxu0 0.0
    %605 = vmatpush1.msra.mxu0 0.0
    %606 = vmatprep.subr.mxu0 0.0
    %607 = vmatpush1.msra.mxu0 0.0
    %608 = vmatprep.subr.mxu0 0.0
    %609 = vmatpush1.msra.mxu0 0.0
    %610 = vmatprep.subr.mxu0 0.0
    %611 = vmatpush1.msra.mxu0 0.0
    %612 = vmatprep.subr.mxu0 0.0
    %613 = vmatpush1.msra.mxu0 0.0
    %614 = vmatprep.subr.mxu0 0.0
    %615 = vmatpush1.msra.mxu0 0.0
    %616 = vmatprep.subr.mxu0 0.0
    %617 = vmatpush1.msra.mxu0 0.0
    %618 = vmatprep.subr.mxu0 0.0
    %619 = vmatpush1.msra.mxu0 0.0
    %620 = vmatprep.subr.mxu0 0.0
    %621 = vmatpush1.msra.mxu0 0.0
    %622 = vmatprep.subr.mxu0 0.0
    %623 = vmatpush1.msra.mxu0 0.0
    %624 = vmatprep.subr.mxu0 0.0
    %625 = vmatpush1.msra.mxu0 0.0
    %626 = vmatprep.subr.mxu0 0.0
    %627 = vmatpush1.msra.mxu0 0.0
    %628 = vmatprep.subr.mxu0 0.0
    %629 = vmatpush1.msra.mxu0 0.0
    %630 = vmatprep.mubr.f32.mxu0 0.0
    %631 = vmatmul.mubr.f32.gmra.mrb[0].mxu0 %v564
    %v632 = vpop.f32.mrb[0].mxu0
    %v633 = vadd.f32 %v559, %v632
    %v634 = vpop.f32.mrb[0].mxu0
    %635 = vdwg.mxu0
    %vm636 = vcmask 254976
    %v637 = vsel %vm636, %v633, 0.0
    %638 = vadd.xlane.f32.xlu0 %v637
    %v639 = vpop.xlane.xlu0 %638
    %v640 = vmul.f32 %v639, %v167
    %v641 = vsub.f32 %v633, %v640
    %v642 = vmul.f32 %v641, %v641
    %v643 = vsel %vm636, %v642, 0.0
    %644 = vadd.xlane.f32.xlu0 %v643
    %v645 = vpop.xlane.xlu0 %644
    %v646 = vmul.f32 %v645, %v167
    %v647 = vadd.f32 %v646, 1e-05
    %v648 = vrsqrt.pop %v647
    %v649 = vmul.f32 %v641, %v648
    %v650 = vlaneseq
    %v651 = vshrl.u32 %v650, 7
    %v652 = vsub.s32 5, %v651
    %v653 = vrot.slane %v69, %v652
    %v654 = vmul.f32 %v649, %v653
    %v655 = vlaneseq
    %v656 = vshrl.u32 %v655, 7
    %v657 = vsub.s32 6, %v656
    %v658 = vrot.slane %v69, %v657
    %v659 = vadd.f32 %v654, %v658
    %v660 = vmul.f32 %v659, 0.5
    %v661 = vmul.f32 %v659, 0.70710677
    %v662 = verf.f32.pop %v661
    %v663 = vadd.f32 %v662, 1.0
    %v664 = vmul.f32 %v660, %v663
    %665 = vst.msk [vmem:[#allocation8] sm:$0x3] %vm636, %v664
    // Predicated region
    $region46: #{tpu_custom_call.1} parent=1 // pred_check
      _
    $region47: #{tpu_custom_call.1} parent=1 // pred_check_branch
      %667 = sbr.rel (0) target = $region49
    $region48: #{tpu_custom_call.1} parent=1 // pred_region
      %s669 = ssub.s32 32, 32
      %670 = vsyncadd [#allocation4], %s669
      %s672 = sshll.u32 [#allocation8], 4
      %s673 = int_to_ptr.vmem [resolvable:$true] %s672
      %675 = dma.vmem_to_hbm [thread:$0]  %s673, 32, %s8, [#allocation4]
    $region49: #{tpu_custom_call.1} parent=1 // pred_fallthru
      _
    // Predicated region
    $region50: #{tpu_custom_call.1} parent=1 // pred_check
      _
    $region51: #{tpu_custom_call.1} parent=1 // pred_check_branch
      %677 = sbr.rel (0) target = $region53
    $region52: #{tpu_custom_call.1} parent=1 // pred_region
      %678 = dma.done [#allocation4], 32
    $region53: #{tpu_custom_call.1} parent=1 // pred_fallthru
      _
    %679 = vsyncpa [#allocation3], 1
    %680 = vsyncpa [#allocation6], 1
    %681 = vsyncpa [#allocation4], 1

</llo_original>
